<compile_context>
chip_gen: v7x
topology: tpu7x:2x2x1
jax: 0.10.0
libtpu: 0.0.40
codegen_flags: <defaults>
</compile_context>

<pallas_src>
import functools

import jax
import jax.numpy as jnp
from jax.experimental import pallas as pl
from jax.experimental.pallas import tpu as pltpu


def _round_up(x, m):
    return ((x + m - 1) // m) * m


def _cdiv(a, b):
    return -(-a // b)


@functools.lru_cache(maxsize=1)
def _device_kind():
    try:
        return jax.devices()[0].device_kind.lower()
    except Exception:
        return ""


@functools.lru_cache(maxsize=1)
def _vmem_budget_and_limit():
    """(tile-plan budget, scoped vmem_limit_bytes), derived per chip generation."""
    phys = None
    try:
        phys = int(getattr(pltpu.get_tpu_info(), "vmem_capacity_bytes"))
    except Exception:
        phys = None
    if not phys:
        kind = _device_kind()
        if "v7" in kind:
            phys = 64 << 20          # v7x: 64 MiB physical per TC
        elif "v5" in kind or "v6" in kind:
            phys = 128 << 20         # v5e / v6e: 128 MiB physical
        else:
            phys = 64 << 20          # conservative default for unknown chips
    budget = (phys * 5) // 8         # what our tile plan may consume
    limit = (phys * 3) // 4          # scoped limit handed to the compiler
    return int(budget), int(limit)


# ----------------------------- kernels --------------------------------------


def _linear_bias_kernel(x_ref, w_ref, b_ref, o_ref):
    # Single-step per output tile: full-K dot on the MXU (f32 accumulate),
    # bias broadcast-add, cast, lane-dense store.  No scratch, no phases.
    o_ref[...] = (
        jnp.dot(x_ref[...], w_ref[...], preferred_element_type=jnp.float32)
        + b_ref[...]
    ).astype(o_ref.dtype)


def _linear_bias_ktiled_kernel(x_ref, w_ref, b_ref, o_ref, acc_ref):
    # Fallback for very large K: accumulate partial products over the K grid
    # axis (last, "arbitrary"), add bias and store on the final step.
    k = pl.program_id(2)

    @pl.when(k == 0)
    def _():
        acc_ref[...] = jnp.zeros_like(acc_ref)

    acc_ref[...] += jnp.dot(x_ref[...], w_ref[...],
                            preferred_element_type=jnp.float32)

    @pl.when(k == pl.num_programs(2) - 1)
    def _():
        o_ref[...] = (acc_ref[...] + b_ref[...]).astype(o_ref.dtype)


# ----------------------------- wrapper ---------------------------------------


@functools.partial(jax.jit, static_argnames=("n_out", "force_k_tiled"))
def linear_pallas(x, w, b, *, n_out=None, force_k_tiled=False):
    """y = x @ w + b  with x:(M,K), w:(Kw,N), b:(1,N) -> y:(M, n_out).

    w / b may already be zero-padded to (8,128)-aligned shapes (K <= Kw); in
    that case no padding is done per call.  Only the first n_out (default N)
    output columns are returned.
    """
    M, K = x.shape
    Kw, N = w.shape
    assert K <= Kw and b.shape == (1, N)
    if n_out is None:
        n_out = N
    assert n_out <= N

    budget, vmem_limit = _vmem_budget_and_limit()
    bytes_per = 4  # f32

    Np = _round_up(N, 128)       # lane-dense output columns
    Kp = _round_up(Kw, 128)      # lane-aligned contraction

    def plan_bytes(tm, tk, tn, acc):
        # conservative: count every operand double-buffered (+ f32 acc scratch)
        total = 2 * (tm * tk + tk * tn + tn + tm * tn) * bytes_per
        if acc:
            total += tm * tn * bytes_per
        return total

    def row_tile(n_tiles):
        # tighten the row tile to the batch -> at most (n_tiles*8 - 1) pad rows
        return _round_up(_cdiv(M, n_tiles), 8)

    # advisory cost estimate (unpadded sizes) so XLA schedules pad/slice around
    # the custom call sensibly
    cost = pl.CostEstimate(
        flops=2 * M * Kw * N,
        transcendentals=0,
        bytes_accessed=(M * Kw + Kw * N + N + M * N) * bytes_per,
    )

    # ---- choose the lane (output-column) tile: whole weight resident if possible
    tn = None
    if not force_k_tiled:
        for cand in (Np, 512, 256, 128):
            if cand > Np or Np % cand:
                continue
            if plan_bytes(8, Kp, cand, acc=False) <= budget:
                tn = cand
                break

    if tn is not None:
        # ------------------- full-K resident fast path -----------------------
        tm = 8
        for target in (512, 256, 128, 64, 32, 16, 8):
            cand = row_tile(max(1, _cdiv(M, target)))
            if plan_bytes(cand, Kp, tn, acc=False) <= budget:
                tm = cand
                break
        n_m = _cdiv(M, tm)

        # v7x has two TensorCores: give both work when the grid would otherwise
        # be a single program (skip tiny launch-bound batches).
        if "v7" in _device_kind() and (Np // tn) * n_m == 1 and M >= 16:
            n_m = 2
            tm = row_tile(2)

        Mp = n_m * tm
        if (Mp, Kp) != (M, K):
            x = jnp.pad(x, ((0, Mp - M), (0, Kp - K)))
        if (Kp, Np) != (Kw, N):       # no-op for pre-padded parameters
            w = jnp.pad(w, ((0, Kp - Kw), (0, Np - N)))
        if Np != N:
            b = jnp.pad(b, ((0, 0), (0, Np - N)))

        # N outermost -> the weight block is fetched once per j and stays
        # resident across all M tiles.
        grid = (Np // tn, n_m)
        out = pl.pallas_call(
            _linear_bias_kernel,
            out_shape=jax.ShapeDtypeStruct((Mp, Np), x.dtype),
            grid_spec=pltpu.PrefetchScalarGridSpec(
                num_scalar_prefetch=0,
                grid=grid,
                in_specs=[
                    pl.BlockSpec((tm, Kp), lambda j, i: (i, 0)),  # x rows, full K
                    pl.BlockSpec((Kp, tn), lambda j, i: (0, j)),  # resident weight
                    pl.BlockSpec((1, tn), lambda j, i: (0, j)),   # bias
                ],
                out_specs=pl.BlockSpec((tm, tn), lambda j, i: (i, j)),
            ),
            compiler_params=pltpu.CompilerParams(
                dimension_semantics=("parallel", "parallel"),
                vmem_limit_bytes=vmem_limit,
            ),
            cost_estimate=cost,
        )(x, w, b)
    else:
        # ------------------- K-tiled fallback (huge input_dim) ---------------
        tn = 128
        tm = row_tile(max(1, _cdiv(M, 128)))
        if force_k_tiled:
            tk = 128                                   # force a multi-step reduction
        else:
            tk = 128
            for cand in range(Kp, 0, -128):            # largest divisor of Kp that fits
                if Kp % cand:
                    continue
                if plan_bytes(tm, cand, tn, acc=True) <= budget:
                    tk = cand
                    break
        n_m = _cdiv(M, tm)
        Mp = n_m * tm
        if (Mp, Kp) != (M, K):
            x = jnp.pad(x, ((0, Mp - M), (0, Kp - K)))
        if (Kp, Np) != (Kw, N):
            w = jnp.pad(w, ((0, Kp - Kw), (0, Np - N)))
        if Np != N:
            b = jnp.pad(b, ((0, 0), (0, Np - N)))

        grid = (Np // tn, n_m, Kp // tk)               # reduction axis last
        out = pl.pallas_call(
            _linear_bias_ktiled_kernel,
            out_shape=jax.ShapeDtypeStruct((Mp, Np), x.dtype),
            grid_spec=pltpu.PrefetchScalarGridSpec(
                num_scalar_prefetch=0,
                grid=grid,
                in_specs=[
                    pl.BlockSpec((tm, tk), lambda j, i, k: (i, k)),
                    pl.BlockSpec((tk, tn), lambda j, i, k: (k, j)),
                    pl.BlockSpec((1, tn), lambda j, i, k: (0, j)),
                ],
                out_specs=pl.BlockSpec((tm, tn), lambda j, i, k: (i, j)),
                scratch_shapes=[pltpu.VMEM((tm, tn), jnp.float32)],
            ),
            compiler_params=pltpu.CompilerParams(
                dimension_semantics=("parallel", "parallel", "arbitrary"),
                vmem_limit_bytes=vmem_limit,
            ),
            cost_estimate=cost,
        )(x, w, b)

    return out[:M, :n_out]


# ----------------------------- module ----------------------------------------


class PreferenceNetPallas:
    """JAX/Pallas port of PreferenceNet; forward() runs the Pallas kernel."""

    def __init__(self, input_dim, hidden_dim, output_dim, num_users,
                 num_prototypes, key):
        k_w, k_b, k_proto, k_user = jax.random.split(key, 4)
        # nn.Linear default init: U(-1/sqrt(fan_in), 1/sqrt(fan_in))
        bound = 1.0 / (input_dim ** 0.5)
        # stored transposed relative to PyTorch: (D_in, D_out)
        w = jax.random.uniform(k_w, (input_dim, output_dim), jnp.float32,
                               -bound, bound)
        bias = jax.random.uniform(k_b, (1, output_dim), jnp.float32,
                                  -bound, bound)
        # Pre-pad the static parameters ONCE so forward() never re-pads the
        # weight through HBM on every call (perf-review item).
        kp = _round_up(input_dim, 128)
        np_ = _round_up(output_dim, 128)
        self.weight = jnp.pad(w, ((0, kp - input_dim), (0, np_ - output_dim)))
        self.bias = jnp.pad(bias, ((0, 0), (0, np_ - output_dim)))
        self.in_dim = input_dim
        self.out_dim = output_dim
        # parameters present in the module but unused in forward():
        self.prototypes = jax.random.normal(
            k_proto, (num_prototypes, input_dim), jnp.float32)
        self.user_weights = jax.random.uniform(
            k_user, (num_users, num_prototypes), jnp.float32)

    def forward(self, x):
        return linear_pallas(x, self.weight, self.bias, n_out=self.out_dim)


if __name__ == "__main__":
    key = jax.random.PRNGKey(0)
    k_param, k_x, k_x2, k_w2, k_b2 = jax.random.split(key, 5)

    # small shapes consistent with the module's forward (a single Linear)
    batch = 8
    input_dim = 256     # stands in for 2 * embedding_dim, kept small
    hidden_dim = 64     # unused by forward, kept for signature parity
    output_dim = 128
    num_users = 4
    num_prototypes = 4

    net = PreferenceNetPallas(input_dim, hidden_dim, output_dim,
                              num_users, num_prototypes, k_param)

    x = jax.random.normal(k_x, (batch, input_dim), jnp.float32)
    y = jax.block_until_ready(net.forward(x))

    # correctness check vs plain-JAX reference (un-padded parameter views)
    y_ref = x @ net.weight[:input_dim, :output_dim] + net.bias[:, :output_dim]
    assert y.shape == (batch, output_dim)
    assert jnp.allclose(y, y_ref, atol=1e-4, rtol=1e-4)

    # non-(8,128)-aligned shapes exercise the per-call padding path
    x2 = jax.random.normal(k_x2, (5, 200), jnp.float32)
    w2 = jax.random.normal(k_w2, (200, 96), jnp.float32) * 0.05
    b2 = jax.random.normal(k_b2, (1, 96), jnp.float32) * 0.05
    y2 = jax.block_until_ready(linear_pallas(x2, w2, b2))
    y2_ref = x2 @ w2 + b2
    assert y2.shape == (5, 96)
    assert jnp.allclose(y2, y2_ref, atol=1e-4, rtol=1e-4)

    # exercise the K-tiled fallback (accumulator + pl.when init/finalize)
    y3 = jax.block_until_ready(linear_pallas(x2, w2, b2, force_k_tiled=True))
    assert jnp.allclose(y3, y2_ref, atol=1e-4, rtol=1e-4)

    print("KERNEL_OK")
</pallas_src>

<mosaic_0001>
module attributes {stable_mosaic.version = 11 : i64} {
  func.func @_linear_bias_kernel(%arg0: i32, %arg1: i32, %arg2: memref<8x256xf32, #tpu.memory_space<vmem>>, %arg3: memref<256x128xf32, #tpu.memory_space<vmem>>, %arg4: memref<1x128xf32, #tpu.memory_space<vmem>>, %arg5: memref<8x128xf32, #tpu.memory_space<vmem>>) attributes {dimension_semantics = [#tpu.dimension_semantics<parallel>, #tpu.dimension_semantics<parallel>], iteration_bounds = array<i64: 1, 1>, scalar_prefetch = 0 : i64, scratch_operands = 0 : i64, tpu.core_type = #tpu.core_type<tc>, window_params = [{transform_indices = @transform_0, window_bounds = array<i64: 8, 256>}, {transform_indices = @transform_1, window_bounds = array<i64: 256, 128>}, {transform_indices = @transform_2, window_bounds = array<i64: 1, 128>}, {transform_indices = @transform_3, window_bounds = array<i64: 8, 128>}]} {
    %c0 = arith.constant 0 : index
    %c0_0 = arith.constant 0 : index
    %0 = vector.load %arg2[%c0, %c0_0] : memref<8x256xf32, #tpu.memory_space<vmem>>, vector<8x256xf32>
    %c0_1 = arith.constant 0 : index
    %c0_2 = arith.constant 0 : index
    %1 = vector.load %arg3[%c0_1, %c0_2] : memref<256x128xf32, #tpu.memory_space<vmem>>, vector<256x128xf32>
    %cst = arith.constant dense<0.000000e+00> : vector<8x128xf32>
    %2 = tpu.matmul %0, %1, %cst {dimension_numbers = #tpu.dot_dimension_numbers<[1], [0], [0], [1], [0, 0, 1, 1], [], []>} : vector<8x256xf32>, vector<256x128xf32>, vector<8x128xf32> -> vector<8x128xf32>
    %c0_3 = arith.constant 0 : index
    %c0_4 = arith.constant 0 : index
    %3 = vector.load %arg4[%c0_3, %c0_4] : memref<1x128xf32, #tpu.memory_space<vmem>>, vector<1x128xf32>
    %4 = vector.broadcast %3 : vector<1x128xf32> to vector<8x128xf32>
    %5 = arith.addf %2, %4 : vector<8x128xf32>
    %c0_5 = arith.constant 0 : index
    %c0_6 = arith.constant 0 : index
    %6 = vector.load %arg5[%c0_5, %c0_6] : memref<8x128xf32, #tpu.memory_space<vmem>>, vector<8x128xf32>
    tpu.vector_store %arg5[%c0_5, %c0_6], %5 {strides = array<i32>} : memref<8x128xf32, #tpu.memory_space<vmem>>, vector<8x128xf32>,
    return
  }
  func.func @transform_0(%arg0: i32, %arg1: i32) -> (i32, i32) {
    %c0_i32 = arith.constant 0 : i32
    %c0_i32_0 = arith.constant 0 : i32
    return %arg1, %c0_i32 : i32, i32
  }
  func.func @transform_1(%arg0: i32, %arg1: i32) -> (i32, i32) {
    %c0_i32 = arith.constant 0 : i32
    %c0_i32_0 = arith.constant 0 : i32
    return %c0_i32, %arg0 : i32, i32
  }
  func.func @transform_2(%arg0: i32, %arg1: i32) -> (i32, i32) {
    %c0_i32 = arith.constant 0 : i32
    %c0_i32_0 = arith.constant 0 : i32
    return %c0_i32, %arg0 : i32, i32
  }
  func.func @transform_3(%arg0: i32, %arg1: i32) -> (i32, i32) {
    %c0_i32 = arith.constant 0 : i32
    return %arg1, %arg0 : i32, i32
  }
}

</mosaic_0001>

<llo_original>
// kernel: linear_pallas.1
$region0: #{linear_pallas.1}
  #allocation0 [shape = 'u32[]', space=smem, size = 0x4, offset = 0x4, fixed_abs, tag = 'smem constant byte address 0x4 - core index']
  #allocation1 [shape = 'u32[144,128]{1,0:T(1,128)}', space=vmem, size = 0x12000, scoped, tag = 'internal scratch']
  %s0 = inlined_call_operand.hbm [shape: f32[8,256], index: 0, kind: input, shape index: {}]
  %s1 = inlined_call_operand.hbm [shape: f32[256,128], index: 1, kind: input, shape index: {}]
  %s2 = inlined_call_operand.vmem [shape: f32[1,128], index: 2, kind: input, shape index: {}]
  %s3 = inlined_call_operand.hbm [shape: f32[8,128], index: 3, kind: output, shape index: {}]
  %s4 = sld [smem:[#allocation0]]
  $region30: #{linear_pallas.1} parent=0
    _
  %s6 = ssub.s32 1, %s4
  %s7 = scalar_select 0, %s6, %s4
  $region1: #{linear_pallas.1} parent=0
    #allocation2 [shape = 'u8[8192]{0}', space=vmem, size = 0x2000, scoped, tag = 'input window, operand 0, single buffered']
    #allocation3 [shape = 's32[1]{0}', space=sflag, size = 0x4, scoped, tag = 'scoped memory for linear_pallas.1']
    #allocation4 [shape = 's32[1]{0}', space=sflag, size = 0x4, scoped, tag = 'scoped memory for linear_pallas.1']
    #allocation5 [shape = 'u8[131072]{0}', space=vmem, size = 0x20000, scoped, tag = 'input window, operand 1, single buffered']
    #allocation6 [shape = 's32[1]{0}', space=sflag, size = 0x4, scoped, tag = 'scoped memory for linear_pallas.1']
    #allocation7 [shape = 'u8[4096]{0}', space=vmem, size = 0x1000, scoped, tag = 'output window, operand 0, single buffered']
    %8 = vsyncpa [#allocation3], 0
    %9 = vsyncpa [#allocation6], 0
    %10 = vsyncpa [#allocation4], 0
    // Predicated region
    $region2: #{linear_pallas.1} parent=1 // pred_check
      _
    $region3: #{linear_pallas.1} parent=1 // pred_check_branch
      %12 = sbr.rel (0) target = $region5
    $region4: #{linear_pallas.1} parent=1 // pred_region
      %s14 = ssub.s32 256, 256
      %15 = vsyncadd [#allocation3], %s14
      %s17 = sshll.u32 [#allocation2], 4
      %s18 = int_to_ptr.vmem [resolvable:$true] %s17
      %20 = dma.hbm_to_vmem [thread:$0]  %s0, 256, %s18, [#allocation3]
    $region5: #{linear_pallas.1} parent=1 // pred_fallthru
      _
    // Predicated region
    $region6: #{linear_pallas.1} parent=1 // pred_check
      _
    $region7: #{linear_pallas.1} parent=1 // pred_check_branch
      %22 = sbr.rel (0) target = $region9
    $region8: #{linear_pallas.1} parent=1 // pred_region
      %s24 = ssub.s32 4096, 4096
      %25 = vsyncadd [#allocation6], %s24
      %s26 = sshll.u32 [#allocation5], 4
      %s27 = int_to_ptr.vmem [resolvable:$true] %s26
      %32 = dma.hbm_to_vmem [thread:$0]  %s1, 4096, %s27, [#allocation6], 128, 128, 8
    $region9: #{linear_pallas.1} parent=1 // pred_fallthru
      _
    // Predicated region
    $region10: #{linear_pallas.1} parent=1 // pred_check
      _
    $region11: #{linear_pallas.1} parent=1 // pred_check_branch
      %34 = sbr.rel (0) target = $region13
    $region12: #{linear_pallas.1} parent=1 // pred_region
      _
    $region13: #{linear_pallas.1} parent=1 // pred_fallthru
      _
    // Predicated region
    $region14: #{linear_pallas.1} parent=1 // pred_check
      _
    $region15: #{linear_pallas.1} parent=1 // pred_check_branch
      %36 = sbr.rel (0) target = $region17
    $region16: #{linear_pallas.1} parent=1 // pred_region
      %37 = dma.done [#allocation3], 256
    $region17: #{linear_pallas.1} parent=1 // pred_fallthru
      _
    // Predicated region
    $region18: #{linear_pallas.1} parent=1 // pred_check
      _
    $region19: #{linear_pallas.1} parent=1 // pred_check_branch
      %39 = sbr.rel (0) target = $region21
    $region20: #{linear_pallas.1} parent=1 // pred_region
      %40 = dma.done [#allocation6], 4096
    $region21: #{linear_pallas.1} parent=1 // pred_fallthru
      _
    %v41 = vld [vmem:[#allocation2] sm:$0xff]
    %v42 = vld [vmem:[#allocation2 + $0x8] sm:$0xff]
    %v43 = vld [vmem:[#allocation5] sm:$0xff]
    %v44 = vld [vmem:[#allocation5 + $0x8] sm:$0xff]
    %v45 = vld [vmem:[#allocation5 + $0x10] sm:$0xff]
    %v46 = vld [vmem:[#allocation5 + $0x18] sm:$0xff]
    %v47 = vld [vmem:[#allocation5 + $0x20] sm:$0xff]
    %v48 = vld [vmem:[#allocation5 + $0x28] sm:$0xff]
    %v49 = vld [vmem:[#allocation5 + $0x30] sm:$0xff]
    %v50 = vld [vmem:[#allocation5 + $0x38] sm:$0xff]
    %v51 = vld [vmem:[#allocation5 + $0x40] sm:$0xff]
    %v52 = vld [vmem:[#allocation5 + $0x48] sm:$0xff]
    %v53 = vld [vmem:[#allocation5 + $0x50] sm:$0xff]
    %v54 = vld [vmem:[#allocation5 + $0x58] sm:$0xff]
    %v55 = vld [vmem:[#allocation5 + $0x60] sm:$0xff]
    %v56 = vld [vmem:[#allocation5 + $0x68] sm:$0xff]
    %v57 = vld [vmem:[#allocation5 + $0x70] sm:$0xff]
    %v58 = vld [vmem:[#allocation5 + $0x78] sm:$0xff]
    %v59 = vld [vmem:[#allocation5 + $0x80] sm:$0xff]
    %v60 = vld [vmem:[#allocation5 + $0x88] sm:$0xff]
    %v61 = vld [vmem:[#allocation5 + $0x90] sm:$0xff]
    %v62 = vld [vmem:[#allocation5 + $0x98] sm:$0xff]
    %v63 = vld [vmem:[#allocation5 + $0xa0] sm:$0xff]
    %v64 = vld [vmem:[#allocation5 + $0xa8] sm:$0xff]
    %v65 = vld [vmem:[#allocation5 + $0xb0] sm:$0xff]
    %v66 = vld [vmem:[#allocation5 + $0xb8] sm:$0xff]
    %v67 = vld [vmem:[#allocation5 + $0xc0] sm:$0xff]
    %v68 = vld [vmem:[#allocation5 + $0xc8] sm:$0xff]
    %v69 = vld [vmem:[#allocation5 + $0xd0] sm:$0xff]
    %v70 = vld [vmem:[#allocation5 + $0xd8] sm:$0xff]
    %v71 = vld [vmem:[#allocation5 + $0xe0] sm:$0xff]
    %v72 = vld [vmem:[#allocation5 + $0xe8] sm:$0xff]
    %v73 = vld [vmem:[#allocation5 + $0xf0] sm:$0xff]
    %v74 = vld [vmem:[#allocation5 + $0xf8] sm:$0xff]
    %v75 = vld [vmem:[%s2] sm:$0x1]
    %v77 = vlaneseq
    %v78 = vshrl.u32 %v77, 7
    %v79 = vsub.s32 0, %v78
    %v80 = vrot.slane %v75, %v79
    %82 = vmatprep.subr.mxu0 0.0
    %83 = vmatpush1.msra.mxu0 %v43
    %84 = vmatprep.subr.mxu0 0.0
    %85 = vmatpush1.msra.mxu0 %v44
    %86 = vmatprep.subr.mxu0 0.0
    %87 = vmatpush1.msra.mxu0 %v45
    %88 = vmatprep.subr.mxu0 0.0
    %89 = vmatpush1.msra.mxu0 %v46
    %90 = vmatprep.subr.mxu0 0.0
    %91 = vmatpush1.msra.mxu0 %v47
    %92 = vmatprep.subr.mxu0 0.0
    %93 = vmatpush1.msra.mxu0 %v48
    %94 = vmatprep.subr.mxu0 0.0
    %95 = vmatpush1.msra.mxu0 %v49
    %96 = vmatprep.subr.mxu0 0.0
    %97 = vmatpush1.msra.mxu0 %v50
    %98 = vmatprep.subr.mxu0 0.0
    %99 = vmatpush1.msra.mxu0 %v51
    %100 = vmatprep.subr.mxu0 0.0
    %101 = vmatpush1.msra.mxu0 %v52
    %102 = vmatprep.subr.mxu0 0.0
    %103 = vmatpush1.msra.mxu0 %v53
    %104 = vmatprep.subr.mxu0 0.0
    %105 = vmatpush1.msra.mxu0 %v54
    %106 = vmatprep.subr.mxu0 0.0
    %107 = vmatpush1.msra.mxu0 %v55
    %108 = vmatprep.subr.mxu0 0.0
    %109 = vmatpush1.msra.mxu0 %v56
    %110 = vmatprep.subr.mxu0 0.0
    %111 = vmatpush1.msra.mxu0 %v57
    %112 = vmatprep.subr.mxu0 0.0
    %113 = vmatpush1.msra.mxu0 %v58
    %114 = vmatprep.subr.mxu0 0.0
    %115 = vmatpush1.msra.mxu0 %v59
    %116 = vmatprep.subr.mxu0 0.0
    %117 = vmatpush1.msra.mxu0 %v60
    %118 = vmatprep.subr.mxu0 0.0
    %119 = vmatpush1.msra.mxu0 %v61
    %120 = vmatprep.subr.mxu0 0.0
    %121 = vmatpush1.msra.mxu0 %v62
    %122 = vmatprep.subr.mxu0 0.0
    %123 = vmatpush1.msra.mxu0 %v63
    %124 = vmatprep.subr.mxu0 0.0
    %125 = vmatpush1.msra.mxu0 %v64
    %126 = vmatprep.subr.mxu0 0.0
    %127 = vmatpush1.msra.mxu0 %v65
    %128 = vmatprep.subr.mxu0 0.0
    %129 = vmatpush1.msra.mxu0 %v66
    %130 = vmatprep.subr.mxu0 0.0
    %131 = vmatpush1.msra.mxu0 %v67
    %132 = vmatprep.subr.mxu0 0.0
    %133 = vmatpush1.msra.mxu0 %v68
    %134 = vmatprep.subr.mxu0 0.0
    %135 = vmatpush1.msra.mxu0 %v69
    %136 = vmatprep.subr.mxu0 0.0
    %137 = vmatpush1.msra.mxu0 %v70
    %138 = vmatprep.subr.mxu0 0.0
    %139 = vmatpush1.msra.mxu0 %v71
    %140 = vmatprep.subr.mxu0 0.0
    %141 = vmatpush1.msra.mxu0 %v72
    %142 = vmatprep.subr.mxu0 0.0
    %143 = vmatpush1.msra.mxu0 %v73
    %144 = vmatprep.subr.mxu0 0.0
    %145 = vmatpush1.msra.mxu0 %v74
    %146 = vmatprep.mubr.f32.mxu0 %v42
    %147 = vmatmul.mubr.f32.gmra.mrb[0].mxu0 %v41
    %v148 = vpop.f32.mrb[0].mxu0
    %v149 = vadd.f32 %v80, %v148
    %v150 = vpop.f32.mrb[0].mxu0
    %151 = vdwg.mxu0
    %152 = vst [vmem:[#allocation7] sm:$0xff] %v149
    // Predicated region
    $region22: #{linear_pallas.1} parent=1 // pred_check
      _
    $region23: #{linear_pallas.1} parent=1 // pred_check_branch
      %154 = sbr.rel (0) target = $region25
    $region24: #{linear_pallas.1} parent=1 // pred_region
      %s156 = ssub.s32 128, 128
      %157 = vsyncadd [#allocation4], %s156
      %s159 = sshll.u32 [#allocation7], 4
      %s160 = int_to_ptr.vmem [resolvable:$true] %s159
      %162 = dma.vmem_to_hbm [thread:$0]  %s160, 128, %s3, [#allocation4]
    $region25: #{linear_pallas.1} parent=1 // pred_fallthru
      _
    // Predicated region
    $region26: #{linear_pallas.1} parent=1 // pred_check
      _
    $region27: #{linear_pallas.1} parent=1 // pred_check_branch
      %164 = sbr.rel (0) target = $region29
    $region28: #{linear_pallas.1} parent=1 // pred_region
      %165 = dma.done [#allocation4], 128
    $region29: #{linear_pallas.1} parent=1 // pred_fallthru
      _
    %166 = vsyncpa [#allocation3], 1
    %167 = vsyncpa [#allocation6], 1
    %168 = vsyncpa [#allocation4], 1

</llo_original>
